<compile_context>
chip_gen: v6e
topology: v6e:2x2x1
jax: 0.10.0
libtpu: 0.0.40
codegen_flags: <defaults>
</compile_context>

<pallas_src>
import jax
import jax.numpy as jnp
from jax.experimental import pallas as pl
from jax.experimental.pallas import tpu as pltpu

_LANE = 128
_SUBLANE = 8
_VMEM_LIMIT_BYTES = 32 * 1024 * 1024        # explicit; v5e default is only 16 MiB
_PIPELINE_BUDGET_FRAC = 0.75                # ~24 MiB of the 32 MiB scoped limit


def _round_up(x, m):
    return ((x + m - 1) // m) * m


def gnb_kernel(x_ref, w1_ref, w2_ref, bias_ref, out_ref):
    # Stream x in its native dtype; upcast in VMEM (perf item 1).
    x = x_ref[...].astype(jnp.float32)                                # (TILE_N, F)
    acc = jnp.dot(x * x, w1_ref[...],
                  preferred_element_type=jnp.float32,
                  precision=jax.lax.Precision.HIGHEST)
    acc = acc + jnp.dot(x, w2_ref[...],
                        preferred_element_type=jnp.float32,
                        precision=jax.lax.Precision.HIGHEST)
    out_ref[...] = (acc + bias_ref[...]).astype(out_ref.dtype)        # (TILE_N, C)


def _pick_tile_n(N, F, C, x_itemsize):
    """Rows per grid step, sized by padded bytes-per-step (perf items 2-4)."""
    f_pad_lane = _round_up(F, _LANE)
    c_pad_lane = _round_up(C, _LANE)

    # Resident params (w1, w2, bias): f32, lane-padded, double-buffered by the
    # default pipeline (constant index_map => no re-DMA, but 2 buffers exist).
    param_bytes = 2 * (2 * _round_up(F, _SUBLANE) * c_pad_lane * 4) \
                  + 2 * (_SUBLANE * c_pad_lane * 4)

    budget = int(_VMEM_LIMIT_BYTES * _PIPELINE_BUDGET_FRAC) - param_bytes
    budget = max(budget, 1 << 20)

    # Per row of one grid step: double-buffered x block + double-buffered out
    # block, both lane-padded.
    per_row = 2 * f_pad_lane * x_itemsize + 2 * c_pad_lane * 4
    tile = budget // per_row

    # ~8 MiB of x per step is already deep into the HBM roofline; cap there.
    tile = min(tile, (8 * 1024 * 1024) // max(F * x_itemsize, 1))
    tile = max(_SUBLANE, (tile // _SUBLANE) * _SUBLANE)

    n_pad = _round_up(N, _SUBLANE)
    # Guarantee >= 2 grid steps when possible: keeps both v7x TensorCores busy
    # and keeps input/output pipelining alive. Harmless on v5e/v6e.
    if n_pad > _SUBLANE:
        tile = min(tile, _round_up(pl.cdiv(n_pad, 2), _SUBLANE))
    return min(tile, n_pad)


def gaussian_naive_bayes(x, means, variances, class_priors, tile_n=None):
    """x: (N, F) any float dtype; means/variances: (C, F); class_priors: (C,).

    Returns (N, C) float32 log joint likelihoods (PyTorch forward semantics).
    """
    means = means.astype(jnp.float32)
    variances = variances.astype(jnp.float32)
    class_priors = class_priors.astype(jnp.float32)

    N, F = x.shape
    C, _ = means.shape

    # --- parameter-only math, computed once in the wrapper (tiny: O(C*F)) ---
    v = jnp.abs(variances)                                            # (C, F)
    inv = 1.0 / v                                                     # (C, F)
    const = -0.5 * jnp.sum(jnp.log(2.0 * jnp.pi * v), axis=-1)        # (C,)
    msq = jnp.sum(means * means * inv, axis=-1)                       # (C,)
    w1 = jnp.transpose(-0.5 * inv)                                    # (F, C)
    w2 = jnp.transpose(means * inv)                                   # (F, C)
    bias = (const - 0.5 * msq + jnp.log(class_priors)).reshape(1, C)  # (1, C)

    x_itemsize = jnp.dtype(x.dtype).itemsize
    if tile_n is None:
        tile_n = _pick_tile_n(N, F, C, x_itemsize)
    grid = (pl.cdiv(N, tile_n),)

    # Memory-bound: tell XLA so it schedules around the call accordingly.
    cost = pl.CostEstimate(
        flops=int(4 * N * F * C + N * F),
        transcendentals=0,
        bytes_accessed=int(N * F * x_itemsize + N * C * 4 + 2 * F * C * 4 + C * 4),
    )

    return pl.pallas_call(
        gnb_kernel,
        out_shape=jax.ShapeDtypeStruct((N, C), jnp.float32),
        grid=grid,
        in_specs=[
            pl.BlockSpec((tile_n, F), lambda i: (i, 0)),   # streamed x (native dtype)
            pl.BlockSpec((F, C), lambda i: (0, 0)),        # resident W1
            pl.BlockSpec((F, C), lambda i: (0, 0)),        # resident W2
            pl.BlockSpec((1, C), lambda i: (0, 0)),        # resident bias
        ],
        out_specs=pl.BlockSpec((tile_n, C), lambda i: (i, 0)),
        compiler_params=pltpu.CompilerParams(
            dimension_semantics=("parallel",),             # 2-TC sharding on v7x
            vmem_limit_bytes=_VMEM_LIMIT_BYTES,
        ),
        cost_estimate=cost,
    )(x, w1, w2, bias)


def reference(x, means, variances, class_priors):
    """Pure-JAX reference mirroring the PyTorch forward exactly."""
    xe = x.astype(jnp.float32)[:, None, :]                # (N, 1, F)
    av = jnp.abs(variances).astype(jnp.float32)           # (C, F)
    ll = jnp.sum(-0.5 * jnp.log(2.0 * jnp.pi * av)
                 - (xe - means.astype(jnp.float32)) ** 2 / av / 2.0, axis=-1)
    return ll + jnp.log(class_priors.astype(jnp.float32))


if __name__ == "__main__":
    features = 32
    classes = 4
    batch = 8

    # Deterministic parameter init mirroring reset_parameters():
    #   means = eye(classes, features), variances = 1, class_priors ~ U(0,1)
    means = jnp.eye(classes, features, dtype=jnp.float32)
    variances = jnp.ones((classes, features), dtype=jnp.float32)

    key = jax.random.PRNGKey(0)
    k_prior, k_x, k_x2 = jax.random.split(key, 3)
    class_priors = jax.random.uniform(k_prior, (classes,), dtype=jnp.float32,
                                      minval=1e-3, maxval=1.0)
    x = jax.random.normal(k_x, (batch, features), dtype=jnp.float32)

    # 1) Small case (single grid step), f32 input.
    out = gaussian_naive_bayes(x, means, variances, class_priors)
    out = jax.block_until_ready(out)
    ref = reference(x, means, variances, class_priors)
    assert out.shape == (batch, classes)
    assert jnp.allclose(out, ref, atol=1e-4, rtol=1e-4), (out, ref)

    # 2) Larger case exercising the grid + a partial final tile (forced tile).
    x_big = jax.random.normal(k_x2, (1000, features), dtype=jnp.float32)
    out_big = gaussian_naive_bayes(x_big, means, variances, class_priors, tile_n=64)
    out_big = jax.block_until_ready(out_big)
    ref_big = reference(x_big, means, variances, class_priors)
    assert out_big.shape == (1000, classes)
    assert jnp.allclose(out_big, ref_big, atol=1e-4, rtol=1e-4)

    # 3) Same data in bf16: streamed natively, upcast in-kernel (auto tile,
    #    >= 2 grid steps). Compared against the reference on the rounded input.
    x_bf = x_big.astype(jnp.bfloat16)
    out_bf = gaussian_naive_bayes(x_bf, means, variances, class_priors)
    out_bf = jax.block_until_ready(out_bf)
    ref_bf = reference(x_bf.astype(jnp.float32), means, variances, class_priors)
    assert out_bf.shape == (1000, classes)
    assert jnp.allclose(out_bf, ref_bf, atol=1e-3, rtol=1e-3)

    print("KERNEL_OK")
</pallas_src>

<mosaic_0001>
module attributes {stable_mosaic.version = 11 : i64} {
  func.func @gnb_kernel(%arg0: i32, %arg1: memref<8x32xf32, #tpu.memory_space<vmem>>, %arg2: memref<32x4xf32, #tpu.memory_space<vmem>>, %arg3: memref<32x4xf32, #tpu.memory_space<vmem>>, %arg4: memref<1x4xf32, #tpu.memory_space<vmem>>, %arg5: memref<8x4xf32, #tpu.memory_space<vmem>>) attributes {dimension_semantics = [#tpu.dimension_semantics<parallel>], iteration_bounds = array<i64: 1>, scalar_prefetch = 0 : i64, scratch_operands = 0 : i64, tpu.core_type = #tpu.core_type<tc>, window_params = [{transform_indices = @transform_0, window_bounds = array<i64: 8, 32>}, {pipeline_mode = #tpu.pipeline_mode<synchronous>, transform_indices = @transform_1, window_bounds = array<i64: 32, 4>}, {pipeline_mode = #tpu.pipeline_mode<synchronous>, transform_indices = @transform_2, window_bounds = array<i64: 32, 4>}, {pipeline_mode = #tpu.pipeline_mode<synchronous>, transform_indices = @transform_3, window_bounds = array<i64: 1, 4>}, {transform_indices = @transform_4, window_bounds = array<i64: 8, 4>}]} {
    %c0 = arith.constant 0 : index
    %c0_0 = arith.constant 0 : index
    %0 = vector.load %arg1[%c0, %c0_0] : memref<8x32xf32, #tpu.memory_space<vmem>>, vector<8x32xf32>
    %1 = arith.mulf %0, %0 : vector<8x32xf32>
    %c0_1 = arith.constant 0 : index
    %c0_2 = arith.constant 0 : index
    %2 = vector.load %arg2[%c0_1, %c0_2] : memref<32x4xf32, #tpu.memory_space<vmem>>, vector<32x4xf32>
    %cst = arith.constant dense<0.000000e+00> : vector<8x4xf32>
    %3 = tpu.matmul %1, %2, %cst {dimension_numbers = #tpu.dot_dimension_numbers<[1], [0], [0], [1], [0, 0, 1, 1], [], []>, precision = #tpu.contract_precision<fp32>} : vector<8x32xf32>, vector<32x4xf32>, vector<8x4xf32> -> vector<8x4xf32>
    %c0_3 = arith.constant 0 : index
    %c0_4 = arith.constant 0 : index
    %4 = vector.load %arg3[%c0_3, %c0_4] : memref<32x4xf32, #tpu.memory_space<vmem>>, vector<32x4xf32>
    %cst_5 = arith.constant dense<0.000000e+00> : vector<8x4xf32>
    %5 = tpu.matmul %0, %4, %cst_5 {dimension_numbers = #tpu.dot_dimension_numbers<[1], [0], [0], [1], [0, 0, 1, 1], [], []>, precision = #tpu.contract_precision<fp32>} : vector<8x32xf32>, vector<32x4xf32>, vector<8x4xf32> -> vector<8x4xf32>
    %6 = arith.addf %3, %5 : vector<8x4xf32>
    %c0_6 = arith.constant 0 : index
    %c0_7 = arith.constant 0 : index
    %7 = vector.load %arg4[%c0_6, %c0_7] : memref<1x4xf32, #tpu.memory_space<vmem>>, vector<1x4xf32>
    %8 = vector.broadcast %7 : vector<1x4xf32> to vector<8x4xf32>
    %9 = arith.addf %6, %8 : vector<8x4xf32>
    %c0_8 = arith.constant 0 : index
    %c0_9 = arith.constant 0 : index
    %10 = vector.load %arg5[%c0_8, %c0_9] : memref<8x4xf32, #tpu.memory_space<vmem>>, vector<8x4xf32>
    tpu.vector_store %arg5[%c0_8, %c0_9], %9 {strides = array<i32>} : memref<8x4xf32, #tpu.memory_space<vmem>>, vector<8x4xf32>,
    return
  }
  func.func @transform_0(%arg0: i32) -> (i32, i32) {
    %c0_i32 = arith.constant 0 : i32
    %c0_i32_0 = arith.constant 0 : i32
    return %arg0, %c0_i32 : i32, i32
  }
  func.func @transform_1(%arg0: i32) -> (i32, i32) {
    %c0_i32 = arith.constant 0 : i32
    %c0_i32_0 = arith.constant 0 : i32
    %c0_i32_1 = arith.constant 0 : i32
    return %c0_i32, %c0_i32_0 : i32, i32
  }
  func.func @transform_2(%arg0: i32) -> (i32, i32) {
    %c0_i32 = arith.constant 0 : i32
    %c0_i32_0 = arith.constant 0 : i32
    %c0_i32_1 = arith.constant 0 : i32
    return %c0_i32, %c0_i32_0 : i32, i32
  }
  func.func @transform_3(%arg0: i32) -> (i32, i32) {
    %c0_i32 = arith.constant 0 : i32
    %c0_i32_0 = arith.constant 0 : i32
    %c0_i32_1 = arith.constant 0 : i32
    return %c0_i32, %c0_i32_0 : i32, i32
  }
  func.func @transform_4(%arg0: i32) -> (i32, i32) {
    %c0_i32 = arith.constant 0 : i32
    %c0_i32_0 = arith.constant 0 : i32
    return %arg0, %c0_i32 : i32, i32
  }
}

</mosaic_0001>

<llo_original>
// kernel: tpu_custom_call.1
$region0: #{tpu_custom_call.1}
  #allocation0 [shape = 'u32[]', space=smem, size = 0x4, offset = 0x4, fixed_abs, tag = 'smem constant byte address 0x4 - core index']
  #allocation1 [shape = 'u32[144,128]{1,0:T(1,128)}', space=vmem, size = 0x12000, scoped, tag = 'internal scratch']
  %s0 = inlined_call_operand.vmem [shape: f32[8,32], index: 0, kind: input, shape index: {}]
  %s1 = inlined_call_operand.vmem [shape: f32[32,4], index: 1, kind: input, shape index: {}]
  %s2 = inlined_call_operand.vmem [shape: f32[32,4], index: 2, kind: input, shape index: {}]
  %s3 = inlined_call_operand.vmem [shape: f32[1,4], index: 3, kind: input, shape index: {}]
  %s4 = inlined_call_operand.vmem [shape: f32[8,4], index: 4, kind: output, shape index: {}]
  %s5 = sld [smem:[#allocation0]]
  $region26: #{tpu_custom_call.1} parent=0
    _
  %s7 = ssub.s32 1, %s5
  %s8 = scalar_select 0, %s7, %s5
  // Predicated region
  $region2: #{tpu_custom_call.1} parent=0 // pred_check
    _
  $region3: #{tpu_custom_call.1} parent=0 // pred_check_branch
    %10 = sbr.rel (0) target = $region5
  $region4: #{tpu_custom_call.1} parent=0 // pred_region
    _
  $region5: #{tpu_custom_call.1} parent=0 // pred_fallthru
    _
  // Predicated region
  $region6: #{tpu_custom_call.1} parent=0 // pred_check
    _
  $region7: #{tpu_custom_call.1} parent=0 // pred_check_branch
    %12 = sbr.rel (0) target = $region9
  $region8: #{tpu_custom_call.1} parent=0 // pred_region
    _
  $region9: #{tpu_custom_call.1} parent=0 // pred_fallthru
    _
  // Predicated region
  $region10: #{tpu_custom_call.1} parent=0 // pred_check
    _
  $region11: #{tpu_custom_call.1} parent=0 // pred_check_branch
    %14 = sbr.rel (0) target = $region13
  $region12: #{tpu_custom_call.1} parent=0 // pred_region
    _
  $region13: #{tpu_custom_call.1} parent=0 // pred_fallthru
    _
  // Predicated region
  $region14: #{tpu_custom_call.1} parent=0 // pred_check
    _
  $region15: #{tpu_custom_call.1} parent=0 // pred_check_branch
    %16 = sbr.rel (0) target = $region17
  $region16: #{tpu_custom_call.1} parent=0 // pred_region
    _
  $region17: #{tpu_custom_call.1} parent=0 // pred_fallthru
    _
  %v17 = vld [vmem:[%s0] sm:$0xff]
  %v18 = vmul.f32 %v17, %v17
  %v19 = vld [vmem:[%s1] sm:$0xff]
  %v20 = vld [vmem:[%s1 + $0x8] sm:$0xff]
  %v21 = vld [vmem:[%s1 + $0x10] sm:$0xff]
  %v22 = vld [vmem:[%s1 + $0x18] sm:$0xff]
  %v23 = vld [vmem:[%s2] sm:$0xff]
  %v24 = vld [vmem:[%s2 + $0x8] sm:$0xff]
  %v25 = vld [vmem:[%s2 + $0x10] sm:$0xff]
  %v26 = vld [vmem:[%s2 + $0x18] sm:$0xff]
  %vm27 = vcmask 261120
  %v29 = vsel %vm27, %v17, 0
  %31 = vmatprep.subr.mxu0 0.0
  %32 = vmatpush1.msra.mxu0 0.0
  %33 = vmatprep.subr.mxu0 0.0
  %34 = vmatpush1.msra.mxu0 0.0
  %35 = vmatprep.subr.mxu0 0.0
  %36 = vmatpush1.msra.mxu0 0.0
  %37 = vmatprep.subr.mxu0 0.0
  %38 = vmatpush1.msra.mxu0 0.0
  %39 = vmatprep.subr.mxu0 0.0
  %40 = vmatpush1.msra.mxu0 0.0
  %41 = vmatprep.subr.mxu0 0.0
  %42 = vmatpush1.msra.mxu0 0.0
  %43 = vmatprep.subr.mxu0 0.0
  %44 = vmatpush1.msra.mxu0 0.0
  %45 = vmatprep.subr.mxu0 0.0
  %46 = vmatpush1.msra.mxu0 0.0
  %47 = vmatprep.subr.mxu0 0.0
  %48 = vmatpush1.msra.mxu0 0.0
  %49 = vmatprep.subr.mxu0 0.0
  %50 = vmatpush1.msra.mxu0 0.0
  %51 = vmatprep.subr.mxu0 0.0
  %52 = vmatpush1.msra.mxu0 0.0
  %53 = vmatprep.subr.mxu0 0.0
  %54 = vmatpush1.msra.mxu0 0.0
  %55 = vmatprep.subr.mxu0 0.0
  %v56 = vand.u32 %v26, 4294901760
  %57 = vmatpush1.msra.mxu0 %v56
  %58 = vmatprep.subr.mxu0 0.0
  %v59 = vand.u32 %v25, 4294901760
  %60 = vmatpush1.msra.mxu0 %v59
  %61 = vmatprep.subr.mxu0 0.0
  %v62 = vand.u32 %v24, 4294901760
  %63 = vmatpush1.msra.mxu0 %v62
  %64 = vmatprep.subr.mxu0 0.0
  %v65 = vand.u32 %v23, 4294901760
  %66 = vmatpush1.msra.mxu0 %v65
  %67 = vmatprep.subr.mxu0 0.0
  %68 = vmatpush2.msra.mxu0 0.0
  %69 = vmatprep.subr.mxu0 0.0
  %70 = vmatpush2.msra.mxu0 0.0
  %71 = vmatprep.subr.mxu0 0.0
  %72 = vmatpush2.msra.mxu0 0.0
  %73 = vmatprep.subr.mxu0 0.0
  %74 = vmatpush2.msra.mxu0 0.0
  %75 = vmatprep.subr.mxu0 0.0
  %76 = vmatpush2.msra.mxu0 0.0
  %77 = vmatprep.subr.mxu0 0.0
  %78 = vmatpush2.msra.mxu0 0.0
  %79 = vmatprep.subr.mxu0 0.0
  %80 = vmatpush2.msra.mxu0 0.0
  %81 = vmatprep.subr.mxu0 0.0
  %82 = vmatpush2.msra.mxu0 0.0
  %83 = vmatprep.subr.mxu0 0.0
  %84 = vmatpush2.msra.mxu0 0.0
  %85 = vmatprep.subr.mxu0 0.0
  %86 = vmatpush2.msra.mxu0 0.0
  %87 = vmatprep.subr.mxu0 0.0
  %88 = vmatpush2.msra.mxu0 0.0
  %89 = vmatprep.subr.mxu0 0.0
  %90 = vmatpush2.msra.mxu0 0.0
  %91 = vmatprep.subr.mxu0 0.0
  %92 = vmatpush2.msra.mxu0 0.0
  %93 = vmatprep.subr.mxu0 0.0
  %94 = vmatpush2.msra.mxu0 0.0
  %95 = vmatprep.subr.mxu0 0.0
  %96 = vmatpush2.msra.mxu0 0.0
  %97 = vmatprep.subr.mxu0 0.0
  %98 = vmatpush2.msra.mxu0 0.0
  %99 = vmatprep.mubr.f32.mxu0 0.0
  %v100 = vand.u32 %v29, 4294901760
  %v101 = vsub.f32 %v29, %v100
  %v102 = vand.u32 %v101, 4294901760
  %v103 = vsub.f32 %v101, %v102
  %v104 = vand.u32 %v103, 4294901760
  %105 = vmatmul.mubr.f32.gmra.mxu0 %v104
  %v106 = vpop.f32.mrf.mxu0
  %v107 = vadd.f32 0.0, %v106
  %v108 = vpop.f32.mrf.mxu0
  %109 = vdwg.mxu0
  %110 = vmatprep.subr.mxu0 0.0
  %111 = vmatpush1.msra.mxu0 0.0
  %112 = vmatprep.subr.mxu0 0.0
  %113 = vmatpush1.msra.mxu0 0.0
  %114 = vmatprep.subr.mxu0 0.0
  %115 = vmatpush1.msra.mxu0 0.0
  %116 = vmatprep.subr.mxu0 0.0
  %117 = vmatpush1.msra.mxu0 0.0
  %118 = vmatprep.subr.mxu0 0.0
  %119 = vmatpush1.msra.mxu0 0.0
  %120 = vmatprep.subr.mxu0 0.0
  %121 = vmatpush1.msra.mxu0 0.0
  %122 = vmatprep.subr.mxu0 0.0
  %123 = vmatpush1.msra.mxu0 0.0
  %124 = vmatprep.subr.mxu0 0.0
  %125 = vmatpush1.msra.mxu0 0.0
  %126 = vmatprep.subr.mxu0 0.0
  %127 = vmatpush1.msra.mxu0 0.0
  %128 = vmatprep.subr.mxu0 0.0
  %129 = vmatpush1.msra.mxu0 0.0
  %130 = vmatprep.subr.mxu0 0.0
  %131 = vmatpush1.msra.mxu0 0.0
  %132 = vmatprep.subr.mxu0 0.0
  %133 = vmatpush1.msra.mxu0 0.0
  %134 = vmatprep.subr.mxu0 0.0
  %v135 = vand.u32 %v26, 4294901760
  %v136 = vsub.f32 %v26, %v135
  %v137 = vand.u32 %v136, 4294901760
  %v138 = vsub.f32 %v136, %v137
  %v139 = vand.u32 %v138, 4294901760
  %140 = vmatpush1.msra.mxu0 %v139
  %141 = vmatprep.subr.mxu0 0.0
  %v142 = vand.u32 %v25, 4294901760
  %v143 = vsub.f32 %v25, %v142
  %v144 = vand.u32 %v143, 4294901760
  %v145 = vsub.f32 %v143, %v144
  %v146 = vand.u32 %v145, 4294901760
  %147 = vmatpush1.msra.mxu0 %v146
  %148 = vmatprep.subr.mxu0 0.0
  %v149 = vand.u32 %v24, 4294901760
  %v150 = vsub.f32 %v24, %v149
  %v151 = vand.u32 %v150, 4294901760
  %v152 = vsub.f32 %v150, %v151
  %v153 = vand.u32 %v152, 4294901760
  %154 = vmatpush1.msra.mxu0 %v153
  %155 = vmatprep.subr.mxu0 0.0
  %v156 = vand.u32 %v23, 4294901760
  %v157 = vsub.f32 %v23, %v156
  %v158 = vand.u32 %v157, 4294901760
  %v159 = vsub.f32 %v157, %v158
  %v160 = vand.u32 %v159, 4294901760
  %161 = vmatpush1.msra.mxu0 %v160
  %162 = vmatprep.subr.mxu0 0.0
  %163 = vmatpush2.msra.mxu0 0.0
  %164 = vmatprep.subr.mxu0 0.0
  %165 = vmatpush2.msra.mxu0 0.0
  %166 = vmatprep.subr.mxu0 0.0
  %167 = vmatpush2.msra.mxu0 0.0
  %168 = vmatprep.subr.mxu0 0.0
  %169 = vmatpush2.msra.mxu0 0.0
  %170 = vmatprep.subr.mxu0 0.0
  %171 = vmatpush2.msra.mxu0 0.0
  %172 = vmatprep.subr.mxu0 0.0
  %173 = vmatpush2.msra.mxu0 0.0
  %174 = vmatprep.subr.mxu0 0.0
  %175 = vmatpush2.msra.mxu0 0.0
  %176 = vmatprep.subr.mxu0 0.0
  %177 = vmatpush2.msra.mxu0 0.0
  %178 = vmatprep.subr.mxu0 0.0
  %179 = vmatpush2.msra.mxu0 0.0
  %180 = vmatprep.subr.mxu0 0.0
  %181 = vmatpush2.msra.mxu0 0.0
  %182 = vmatprep.subr.mxu0 0.0
  %183 = vmatpush2.msra.mxu0 0.0
  %184 = vmatprep.subr.mxu0 0.0
  %185 = vmatpush2.msra.mxu0 0.0
  %186 = vmatprep.subr.mxu0 0.0
  %187 = vmatpush2.msra.mxu0 0.0
  %188 = vmatprep.subr.mxu0 0.0
  %189 = vmatpush2.msra.mxu0 0.0
  %190 = vmatprep.subr.mxu0 0.0
  %191 = vmatpush2.msra.mxu0 0.0
  %192 = vmatprep.subr.mxu0 0.0
  %193 = vmatpush2.msra.mxu0 0.0
  %194 = vmatprep.mubr.f32.mxu0 0.0
  %v195 = vand.u32 %v29, 4294901760
  %196 = vmatmul.mubr.f32.gmra.mxu0 %v195
  %v197 = vpop.f32.mrf.mxu0
  %v198 = vadd.f32 %v107, %v197
  %v199 = vpop.f32.mrf.mxu0
  %200 = vdwg.mxu0
  %201 = vmatprep.subr.mxu0 0.0
  %202 = vmatpush1.msra.mxu0 0.0
  %203 = vmatprep.subr.mxu0 0.0
  %204 = vmatpush1.msra.mxu0 0.0
  %205 = vmatprep.subr.mxu0 0.0
  %206 = vmatpush1.msra.mxu0 0.0
  %207 = vmatprep.subr.mxu0 0.0
  %208 = vmatpush1.msra.mxu0 0.0
  %209 = vmatprep.subr.mxu0 0.0
  %210 = vmatpush1.msra.mxu0 0.0
  %211 = vmatprep.subr.mxu0 0.0
  %212 = vmatpush1.msra.mxu0 0.0
  %213 = vmatprep.subr.mxu0 0.0
  %214 = vmatpush1.msra.mxu0 0.0
  %215 = vmatprep.subr.mxu0 0.0
  %216 = vmatpush1.msra.mxu0 0.0
  %217 = vmatprep.subr.mxu0 0.0
  %218 = vmatpush1.msra.mxu0 0.0
  %219 = vmatprep.subr.mxu0 0.0
  %220 = vmatpush1.msra.mxu0 0.0
  %221 = vmatprep.subr.mxu0 0.0
  %222 = vmatpush1.msra.mxu0 0.0
  %223 = vmatprep.subr.mxu0 0.0
  %224 = vmatpush1.msra.mxu0 0.0
  %225 = vmatprep.subr.mxu0 0.0
  %v226 = vand.u32 %v26, 4294901760
  %v227 = vsub.f32 %v26, %v226
  %228 = vmatpush1.msra.mxu0 %v227
  %229 = vmatprep.subr.mxu0 0.0
  %v230 = vand.u32 %v25, 4294901760
  %v231 = vsub.f32 %v25, %v230
  %232 = vmatpush1.msra.mxu0 %v231
  %233 = vmatprep.subr.mxu0 0.0
  %v234 = vand.u32 %v24, 4294901760
  %v235 = vsub.f32 %v24, %v234
  %236 = vmatpush1.msra.mxu0 %v235
  %237 = vmatprep.subr.mxu0 0.0
  %v238 = vand.u32 %v23, 4294901760
  %v239 = vsub.f32 %v23, %v238
  %240 = vmatpush1.msra.mxu0 %v239
  %241 = vmatprep.subr.mxu0 0.0
  %242 = vmatpush2.msra.mxu0 0.0
  %243 = vmatprep.subr.mxu0 0.0
  %244 = vmatpush2.msra.mxu0 0.0
  %245 = vmatprep.subr.mxu0 0.0
  %246 = vmatpush2.msra.mxu0 0.0
  %247 = vmatprep.subr.mxu0 0.0
  %248 = vmatpush2.msra.mxu0 0.0
  %249 = vmatprep.subr.mxu0 0.0
  %250 = vmatpush2.msra.mxu0 0.0
  %251 = vmatprep.subr.mxu0 0.0
  %252 = vmatpush2.msra.mxu0 0.0
  %253 = vmatprep.subr.mxu0 0.0
  %254 = vmatpush2.msra.mxu0 0.0
  %255 = vmatprep.subr.mxu0 0.0
  %256 = vmatpush2.msra.mxu0 0.0
  %257 = vmatprep.subr.mxu0 0.0
  %258 = vmatpush2.msra.mxu0 0.0
  %259 = vmatprep.subr.mxu0 0.0
  %260 = vmatpush2.msra.mxu0 0.0
  %261 = vmatprep.subr.mxu0 0.0
  %262 = vmatpush2.msra.mxu0 0.0
  %263 = vmatprep.subr.mxu0 0.0
  %264 = vmatpush2.msra.mxu0 0.0
  %265 = vmatprep.subr.mxu0 0.0
  %266 = vmatpush2.msra.mxu0 0.0
  %267 = vmatprep.subr.mxu0 0.0
  %268 = vmatpush2.msra.mxu0 0.0
  %269 = vmatprep.subr.mxu0 0.0
  %270 = vmatpush2.msra.mxu0 0.0
  %271 = vmatprep.subr.mxu0 0.0
  %272 = vmatpush2.msra.mxu0 0.0
  %273 = vmatprep.mubr.f32.mxu0 0.0
  %v274 = vand.u32 %v29, 4294901760
  %v275 = vsub.f32 %v29, %v274
  %276 = vmatmul.mubr.f32.gmra.mxu0 %v275
  %v277 = vpop.f32.mrf.mxu0
  %v278 = vadd.f32 %v198, %v277
  %v279 = vpop.f32.mrf.mxu0
  %280 = vdwg.mxu0
  %281 = vmatprep.subr.mxu0 0.0
  %282 = vmatpush1.msra.mxu0 0.0
  %283 = vmatprep.subr.mxu0 0.0
  %284 = vmatpush1.msra.mxu0 0.0
  %285 = vmatprep.subr.mxu0 0.0
  %286 = vmatpush1.msra.mxu0 0.0
  %287 = vmatprep.subr.mxu0 0.0
  %288 = vmatpush1.msra.mxu0 0.0
  %289 = vmatprep.subr.mxu0 0.0
  %290 = vmatpush1.msra.mxu0 0.0
  %291 = vmatprep.subr.mxu0 0.0
  %292 = vmatpush1.msra.mxu0 0.0
  %293 = vmatprep.subr.mxu0 0.0
  %294 = vmatpush1.msra.mxu0 0.0
  %295 = vmatprep.subr.mxu0 0.0
  %296 = vmatpush1.msra.mxu0 0.0
  %297 = vmatprep.subr.mxu0 0.0
  %298 = vmatpush1.msra.mxu0 0.0
  %299 = vmatprep.subr.mxu0 0.0
  %300 = vmatpush1.msra.mxu0 0.0
  %301 = vmatprep.subr.mxu0 0.0
  %302 = vmatpush1.msra.mxu0 0.0
  %303 = vmatprep.subr.mxu0 0.0
  %304 = vmatpush1.msra.mxu0 0.0
  %305 = vmatprep.subr.mxu0 0.0
  %v306 = vand.u32 %v26, 4294901760
  %307 = vmatpush1.msra.mxu0 %v306
  %308 = vmatprep.subr.mxu0 0.0
  %v309 = vand.u32 %v25, 4294901760
  %310 = vmatpush1.msra.mxu0 %v309
  %311 = vmatprep.subr.mxu0 0.0
  %v312 = vand.u32 %v24, 4294901760
  %313 = vmatpush1.msra.mxu0 %v312
  %314 = vmatprep.subr.mxu0 0.0
  %v315 = vand.u32 %v23, 4294901760
  %316 = vmatpush1.msra.mxu0 %v315
  %317 = vmatprep.subr.mxu0 0.0
  %318 = vmatpush2.msra.mxu0 0.0
  %319 = vmatprep.subr.mxu0 0.0
  %320 = vmatpush2.msra.mxu0 0.0
  %321 = vmatprep.subr.mxu0 0.0
  %322 = vmatpush2.msra.mxu0 0.0
  %323 = vmatprep.subr.mxu0 0.0
  %324 = vmatpush2.msra.mxu0 0.0
  %325 = vmatprep.subr.mxu0 0.0
  %326 = vmatpush2.msra.mxu0 0.0
  %327 = vmatprep.subr.mxu0 0.0
  %328 = vmatpush2.msra.mxu0 0.0
  %329 = vmatprep.subr.mxu0 0.0
  %330 = vmatpush2.msra.mxu0 0.0
  %331 = vmatprep.subr.mxu0 0.0
  %332 = vmatpush2.msra.mxu0 0.0
  %333 = vmatprep.subr.mxu0 0.0
  %334 = vmatpush2.msra.mxu0 0.0
  %335 = vmatprep.subr.mxu0 0.0
  %336 = vmatpush2.msra.mxu0 0.0
  %337 = vmatprep.subr.mxu0 0.0
  %338 = vmatpush2.msra.mxu0 0.0
  %339 = vmatprep.subr.mxu0 0.0
  %340 = vmatpush2.msra.mxu0 0.0
  %341 = vmatprep.subr.mxu0 0.0
  %342 = vmatpush2.msra.mxu0 0.0
  %343 = vmatprep.subr.mxu0 0.0
  %344 = vmatpush2.msra.mxu0 0.0
  %345 = vmatprep.subr.mxu0 0.0
  %346 = vmatpush2.msra.mxu0 0.0
  %347 = vmatprep.subr.mxu0 0.0
  %348 = vmatpush2.msra.mxu0 0.0
  %349 = vmatprep.mubr.f32.mxu0 0.0
  %v350 = vand.u32 %v29, 4294901760
  %v351 = vsub.f32 %v29, %v350
  %v352 = vand.u32 %v351, 4294901760
  %353 = vmatmul.mubr.f32.gmra.mxu0 %v352
  %v354 = vpop.f32.mrf.mxu0
  %v355 = vadd.f32 %v278, %v354
  %v356 = vpop.f32.mrf.mxu0
  %357 = vdwg.mxu0
  %358 = vmatprep.subr.mxu0 0.0
  %359 = vmatpush1.msra.mxu0 0.0
  %360 = vmatprep.subr.mxu0 0.0
  %361 = vmatpush1.msra.mxu0 0.0
  %362 = vmatprep.subr.mxu0 0.0
  %363 = vmatpush1.msra.mxu0 0.0
  %364 = vmatprep.subr.mxu0 0.0
  %365 = vmatpush1.msra.mxu0 0.0
  %366 = vmatprep.subr.mxu0 0.0
  %367 = vmatpush1.msra.mxu0 0.0
  %368 = vmatprep.subr.mxu0 0.0
  %369 = vmatpush1.msra.mxu0 0.0
  %370 = vmatprep.subr.mxu0 0.0
  %371 = vmatpush1.msra.mxu0 0.0
  %372 = vmatprep.subr.mxu0 0.0
  %373 = vmatpush1.msra.mxu0 0.0
  %374 = vmatprep.subr.mxu0 0.0
  %375 = vmatpush1.msra.mxu0 0.0
  %376 = vmatprep.subr.mxu0 0.0
  %377 = vmatpush1.msra.mxu0 0.0
  %378 = vmatprep.subr.mxu0 0.0
  %379 = vmatpush1.msra.mxu0 0.0
  %380 = vmatprep.subr.mxu0 0.0
  %381 = vmatpush1.msra.mxu0 0.0
  %382 = vmatprep.subr.mxu0 0.0
  %v383 = vand.u32 %v26, 4294901760
  %v384 = vsub.f32 %v26, %v383
  %v385 = vand.u32 %v384, 4294901760
  %386 = vmatpush1.msra.mxu0 %v385
  %387 = vmatprep.subr.mxu0 0.0
  %v388 = vand.u32 %v25, 4294901760
  %v389 = vsub.f32 %v25, %v388
  %v390 = vand.u32 %v389, 4294901760
  %391 = vmatpush1.msra.mxu0 %v390
  %392 = vmatprep.subr.mxu0 0.0
  %v393 = vand.u32 %v24, 4294901760
  %v394 = vsub.f32 %v24, %v393
  %v395 = vand.u32 %v394, 4294901760
  %396 = vmatpush1.msra.mxu0 %v395
  %397 = vmatprep.subr.mxu0 0.0
  %v398 = vand.u32 %v23, 4294901760
  %v399 = vsub.f32 %v23, %v398
  %v400 = vand.u32 %v399, 4294901760
  %401 = vmatpush1.msra.mxu0 %v400
  %402 = vmatprep.subr.mxu0 0.0
  %403 = vmatpush2.msra.mxu0 0.0
  %404 = vmatprep.subr.mxu0 0.0
  %405 = vmatpush2.msra.mxu0 0.0
  %406 = vmatprep.subr.mxu0 0.0
  %407 = vmatpush2.msra.mxu0 0.0
  %408 = vmatprep.subr.mxu0 0.0
  %409 = vmatpush2.msra.mxu0 0.0
  %410 = vmatprep.subr.mxu0 0.0
  %411 = vmatpush2.msra.mxu0 0.0
  %412 = vmatprep.subr.mxu0 0.0
  %413 = vmatpush2.msra.mxu0 0.0
  %414 = vmatprep.subr.mxu0 0.0
  %415 = vmatpush2.msra.mxu0 0.0
  %416 = vmatprep.subr.mxu0 0.0
  %417 = vmatpush2.msra.mxu0 0.0
  %418 = vmatprep.subr.mxu0 0.0
  %419 = vmatpush2.msra.mxu0 0.0
  %420 = vmatprep.subr.mxu0 0.0
  %421 = vmatpush2.msra.mxu0 0.0
  %422 = vmatprep.subr.mxu0 0.0
  %423 = vmatpush2.msra.mxu0 0.0
  %424 = vmatprep.subr.mxu0 0.0
  %425 = vmatpush2.msra.mxu0 0.0
  %426 = vmatprep.subr.mxu0 0.0
  %427 = vmatpush2.msra.mxu0 0.0
  %428 = vmatprep.subr.mxu0 0.0
  %429 = vmatpush2.msra.mxu0 0.0
  %430 = vmatprep.subr.mxu0 0.0
  %431 = vmatpush2.msra.mxu0 0.0
  %432 = vmatprep.subr.mxu0 0.0
  %433 = vmatpush2.msra.mxu0 0.0
  %434 = vmatprep.mubr.f32.mxu0 0.0
  %v435 = vand.u32 %v29, 4294901760
  %436 = vmatmul.mubr.f32.gmra.mxu0 %v435
  %v437 = vpop.f32.mrf.mxu0
  %v438 = vadd.f32 %v355, %v437
  %v439 = vpop.f32.mrf.mxu0
  %440 = vdwg.mxu0
  %441 = vmatprep.subr.mxu0 0.0
  %442 = vmatpush1.msra.mxu0 0.0
  %443 = vmatprep.subr.mxu0 0.0
  %444 = vmatpush1.msra.mxu0 0.0
  %445 = vmatprep.subr.mxu0 0.0
  %446 = vmatpush1.msra.mxu0 0.0
  %447 = vmatprep.subr.mxu0 0.0
  %448 = vmatpush1.msra.mxu0 0.0
  %449 = vmatprep.subr.mxu0 0.0
  %450 = vmatpush1.msra.mxu0 0.0
  %451 = vmatprep.subr.mxu0 0.0
  %452 = vmatpush1.msra.mxu0 0.0
  %453 = vmatprep.subr.mxu0 0.0
  %454 = vmatpush1.msra.mxu0 0.0
  %455 = vmatprep.subr.mxu0 0.0
  %456 = vmatpush1.msra.mxu0 0.0
  %457 = vmatprep.subr.mxu0 0.0
  %458 = vmatpush1.msra.mxu0 0.0
  %459 = vmatprep.subr.mxu0 0.0
  %460 = vmatpush1.msra.mxu0 0.0
  %461 = vmatprep.subr.mxu0 0.0
  %462 = vmatpush1.msra.mxu0 0.0
  %463 = vmatprep.subr.mxu0 0.0
  %464 = vmatpush1.msra.mxu0 0.0
  %465 = vmatprep.subr.mxu0 0.0
  %v466 = vand.u32 %v26, 4294901760
  %467 = vmatpush1.msra.mxu0 %v466
  %468 = vmatprep.subr.mxu0 0.0
  %v469 = vand.u32 %v25, 4294901760
  %470 = vmatpush1.msra.mxu0 %v469
  %471 = vmatprep.subr.mxu0 0.0
  %v472 = vand.u32 %v24, 4294901760
  %473 = vmatpush1.msra.mxu0 %v472
  %474 = vmatprep.subr.mxu0 0.0
  %v475 = vand.u32 %v23, 4294901760
  %476 = vmatpush1.msra.mxu0 %v475
  %477 = vmatprep.subr.mxu0 0.0
  %478 = vmatpush2.msra.mxu0 0.0
  %479 = vmatprep.subr.mxu0 0.0
  %480 = vmatpush2.msra.mxu0 0.0
  %481 = vmatprep.subr.mxu0 0.0
  %482 = vmatpush2.msra.mxu0 0.0
  %483 = vmatprep.subr.mxu0 0.0
  %484 = vmatpush2.msra.mxu0 0.0
  %485 = vmatprep.subr.mxu0 0.0
  %486 = vmatpush2.msra.mxu0 0.0
  %487 = vmatprep.subr.mxu0 0.0
  %488 = vmatpush2.msra.mxu0 0.0
  %489 = vmatprep.subr.mxu0 0.0
  %490 = vmatpush2.msra.mxu0 0.0
  %491 = vmatprep.subr.mxu0 0.0
  %492 = vmatpush2.msra.mxu0 0.0
  %493 = vmatprep.subr.mxu0 0.0
  %494 = vmatpush2.msra.mxu0 0.0
  %495 = vmatprep.subr.mxu0 0.0
  %496 = vmatpush2.msra.mxu0 0.0
  %497 = vmatprep.subr.mxu0 0.0
  %498 = vmatpush2.msra.mxu0 0.0
  %499 = vmatprep.subr.mxu0 0.0
  %500 = vmatpush2.msra.mxu0 0.0
  %501 = vmatprep.subr.mxu0 0.0
  %502 = vmatpush2.msra.mxu0 0.0
  %503 = vmatprep.subr.mxu0 0.0
  %504 = vmatpush2.msra.mxu0 0.0
  %505 = vmatprep.subr.mxu0 0.0
  %506 = vmatpush2.msra.mxu0 0.0
  %507 = vmatprep.subr.mxu0 0.0
  %508 = vmatpush2.msra.mxu0 0.0
  %509 = vmatprep.mubr.f32.mxu0 0.0
  %v510 = vand.u32 %v29, 4294901760
  %511 = vmatmul.mubr.f32.gmra.mxu0 %v510
  %v512 = vpop.f32.mrf.mxu0
  %v513 = vadd.f32 %v438, %v512
  %v514 = vpop.f32.mrf.mxu0
  %515 = vdwg.mxu0
  %v517 = vsel %vm27, %v18, 0
  %519 = vmatprep.subr.mxu0 0.0
  %520 = vmatpush1.msra.mxu0 0.0
  %521 = vmatprep.subr.mxu0 0.0
  %522 = vmatpush1.msra.mxu0 0.0
  %523 = vmatprep.subr.mxu0 0.0
  %524 = vmatpush1.msra.mxu0 0.0
  %525 = vmatprep.subr.mxu0 0.0
  %526 = vmatpush1.msra.mxu0 0.0
  %527 = vmatprep.subr.mxu0 0.0
  %528 = vmatpush1.msra.mxu0 0.0
  %529 = vmatprep.subr.mxu0 0.0
  %530 = vmatpush1.msra.mxu0 0.0
  %531 = vmatprep.subr.mxu0 0.0
  %532 = vmatpush1.msra.mxu0 0.0
  %533 = vmatprep.subr.mxu0 0.0
  %534 = vmatpush1.msra.mxu0 0.0
  %535 = vmatprep.subr.mxu0 0.0
  %536 = vmatpush1.msra.mxu0 0.0
  %537 = vmatprep.subr.mxu0 0.0
  %538 = vmatpush1.msra.mxu0 0.0
  %539 = vmatprep.subr.mxu0 0.0
  %540 = vmatpush1.msra.mxu0 0.0
  %541 = vmatprep.subr.mxu0 0.0
  %542 = vmatpush1.msra.mxu0 0.0
  %543 = vmatprep.subr.mxu0 0.0
  %v544 = vand.u32 %v22, 4294901760
  %545 = vmatpush1.msra.mxu0 %v544
  %546 = vmatprep.subr.mxu0 0.0
  %v547 = vand.u32 %v21, 4294901760
  %548 = vmatpush1.msra.mxu0 %v547
  %549 = vmatprep.subr.mxu0 0.0
  %v550 = vand.u32 %v20, 4294901760
  %551 = vmatpush1.msra.mxu0 %v550
  %552 = vmatprep.subr.mxu0 0.0
  %v553 = vand.u32 %v19, 4294901760
  %554 = vmatpush1.msra.mxu0 %v553
  %555 = vmatprep.subr.mxu0 0.0
  %556 = vmatpush2.msra.mxu0 0.0
  %557 = vmatprep.subr.mxu0 0.0
  %558 = vmatpush2.msra.mxu0 0.0
  %559 = vmatprep.subr.mxu0 0.0
  %560 = vmatpush2.msra.mxu0 0.0
  %561 = vmatprep.subr.mxu0 0.0
  %562 = vmatpush2.msra.mxu0 0.0
  %563 = vmatprep.subr.mxu0 0.0
  %564 = vmatpush2.msra.mxu0 0.0
  %565 = vmatprep.subr.mxu0 0.0
  %566 = vmatpush2.msra.mxu0 0.0
  %567 = vmatprep.subr.mxu0 0.0
  %568 = vmatpush2.msra.mxu0 0.0
  %569 = vmatprep.subr.mxu0 0.0
  %570 = vmatpush2.msra.mxu0 0.0
  %571 = vmatprep.subr.mxu0 0.0
  %572 = vmatpush2.msra.mxu0 0.0
  %573 = vmatprep.subr.mxu0 0.0
  %574 = vmatpush2.msra.mxu0 0.0
  %575 = vmatprep.subr.mxu0 0.0
  %576 = vmatpush2.msra.mxu0 0.0
  %577 = vmatprep.subr.mxu0 0.0
  %578 = vmatpush2.msra.mxu0 0.0
  %579 = vmatprep.subr.mxu0 0.0
  %580 = vmatpush2.msra.mxu0 0.0
  %581 = vmatprep.subr.mxu0 0.0
  %582 = vmatpush2.msra.mxu0 0.0
  %583 = vmatprep.subr.mxu0 0.0
  %584 = vmatpush2.msra.mxu0 0.0
  %585 = vmatprep.subr.mxu0 0.0
  %586 = vmatpush2.msra.mxu0 0.0
  %587 = vmatprep.mubr.f32.mxu0 0.0
  %v588 = vand.u32 %v517, 4294901760
  %v589 = vsub.f32 %v517, %v588
  %v590 = vand.u32 %v589, 4294901760
  %v591 = vsub.f32 %v589, %v590
  %v592 = vand.u32 %v591, 4294901760
  %593 = vmatmul.mubr.f32.gmra.mxu0 %v592
  %v594 = vpop.f32.mrf.mxu0
  %v595 = vadd.f32 %v513, %v594
  %v596 = vpop.f32.mrf.mxu0
  %597 = vdwg.mxu0
  %598 = vmatprep.subr.mxu0 0.0
  %599 = vmatpush1.msra.mxu0 0.0
  %600 = vmatprep.subr.mxu0 0.0
  %601 = vmatpush1.msra.mxu0 0.0
  %602 = vmatprep.subr.mxu0 0.0
  %603 = vmatpush1.msra.mxu0 0.0
  %604 = vmatprep.subr.mxu0 0.0
  %605 = vmatpush1.msra.mxu0 0.0
  %606 = vmatprep.subr.mxu0 0.0
  %607 = vmatpush1.msra.mxu0 0.0
  %608 = vmatprep.subr.mxu0 0.0
  %609 = vmatpush1.msra.mxu0 0.0
  %610 = vmatprep.subr.mxu0 0.0
  %611 = vmatpush1.msra.mxu0 0.0
  %612 = vmatprep.subr.mxu0 0.0
  %613 = vmatpush1.msra.mxu0 0.0
  %614 = vmatprep.subr.mxu0 0.0
  %615 = vmatpush1.msra.mxu0 0.0
  %616 = vmatprep.subr.mxu0 0.0
  %617 = vmatpush1.msra.mxu0 0.0
  %618 = vmatprep.subr.mxu0 0.0
  %619 = vmatpush1.msra.mxu0 0.0
  %620 = vmatprep.subr.mxu0 0.0
  %621 = vmatpush1.msra.mxu0 0.0
  %622 = vmatprep.subr.mxu0 0.0
  %v623 = vand.u32 %v22, 4294901760
  %v624 = vsub.f32 %v22, %v623
  %v625 = vand.u32 %v624, 4294901760
  %v626 = vsub.f32 %v624, %v625
  %v627 = vand.u32 %v626, 4294901760
  %628 = vmatpush1.msra.mxu0 %v627
  %629 = vmatprep.subr.mxu0 0.0
  %v630 = vand.u32 %v21, 4294901760
  %v631 = vsub.f32 %v21, %v630
  %v632 = vand.u32 %v631, 4294901760
  %v633 = vsub.f32 %v631, %v632
  %v634 = vand.u32 %v633, 4294901760
  %635 = vmatpush1.msra.mxu0 %v634
  %636 = vmatprep.subr.mxu0 0.0
  %v637 = vand.u32 %v20, 4294901760
  %v638 = vsub.f32 %v20, %v637
  %v639 = vand.u32 %v638, 4294901760
  %v640 = vsub.f32 %v638, %v639
  %v641 = vand.u32 %v640, 4294901760
  %642 = vmatpush1.msra.mxu0 %v641
  %643 = vmatprep.subr.mxu0 0.0
  %v644 = vand.u32 %v19, 4294901760
  %v645 = vsub.f32 %v19, %v644
  %v646 = vand.u32 %v645, 4294901760
  %v647 = vsub.f32 %v645, %v646
  %v648 = vand.u32 %v647, 4294901760
  %649 = vmatpush1.msra.mxu0 %v648
  %650 = vmatprep.subr.mxu0 0.0
  %651 = vmatpush2.msra.mxu0 0.0
  %652 = vmatprep.subr.mxu0 0.0
  %653 = vmatpush2.msra.mxu0 0.0
  %654 = vmatprep.subr.mxu0 0.0
  %655 = vmatpush2.msra.mxu0 0.0
  %656 = vmatprep.subr.mxu0 0.0
  %657 = vmatpush2.msra.mxu0 0.0
  %658 = vmatprep.subr.mxu0 0.0
  %659 = vmatpush2.msra.mxu0 0.0
  %660 = vmatprep.subr.mxu0 0.0
  %661 = vmatpush2.msra.mxu0 0.0
  %662 = vmatprep.subr.mxu0 0.0
  %663 = vmatpush2.msra.mxu0 0.0
  %664 = vmatprep.subr.mxu0 0.0
  %665 = vmatpush2.msra.mxu0 0.0
  %666 = vmatprep.subr.mxu0 0.0
  %667 = vmatpush2.msra.mxu0 0.0
  %668 = vmatprep.subr.mxu0 0.0
  %669 = vmatpush2.msra.mxu0 0.0
  %670 = vmatprep.subr.mxu0 0.0
  %671 = vmatpush2.msra.mxu0 0.0
  %672 = vmatprep.subr.mxu0 0.0
  %673 = vmatpush2.msra.mxu0 0.0
  %674 = vmatprep.subr.mxu0 0.0
  %675 = vmatpush2.msra.mxu0 0.0
  %676 = vmatprep.subr.mxu0 0.0
  %677 = vmatpush2.msra.mxu0 0.0
  %678 = vmatprep.subr.mxu0 0.0
  %679 = vmatpush2.msra.mxu0 0.0
  %680 = vmatprep.subr.mxu0 0.0
  %681 = vmatpush2.msra.mxu0 0.0
  %682 = vmatprep.mubr.f32.mxu0 0.0
  %v683 = vand.u32 %v517, 4294901760
  %684 = vmatmul.mubr.f32.gmra.mxu0 %v683
  %v685 = vpop.f32.mrf.mxu0
  %v686 = vadd.f32 %v595, %v685
  %v687 = vpop.f32.mrf.mxu0
  %688 = vdwg.mxu0
  %689 = vmatprep.subr.mxu0 0.0
  %690 = vmatpush1.msra.mxu0 0.0
  %691 = vmatprep.subr.mxu0 0.0
  %692 = vmatpush1.msra.mxu0 0.0
  %693 = vmatprep.subr.mxu0 0.0
  %694 = vmatpush1.msra.mxu0 0.0
  %695 = vmatprep.subr.mxu0 0.0
  %696 = vmatpush1.msra.mxu0 0.0
  %697 = vmatprep.subr.mxu0 0.0
  %698 = vmatpush1.msra.mxu0 0.0
  %699 = vmatprep.subr.mxu0 0.0
  %700 = vmatpush1.msra.mxu0 0.0
  %701 = vmatprep.subr.mxu0 0.0
  %702 = vmatpush1.msra.mxu0 0.0
  %703 = vmatprep.subr.mxu0 0.0
  %704 = vmatpush1.msra.mxu0 0.0
  %705 = vmatprep.subr.mxu0 0.0
  %706 = vmatpush1.msra.mxu0 0.0
  %707 = vmatprep.subr.mxu0 0.0
  %708 = vmatpush1.msra.mxu0 0.0
  %709 = vmatprep.subr.mxu0 0.0
  %710 = vmatpush1.msra.mxu0 0.0
  %711 = vmatprep.subr.mxu0 0.0
  %712 = vmatpush1.msra.mxu0 0.0
  %713 = vmatprep.subr.mxu0 0.0
  %v714 = vand.u32 %v22, 4294901760
  %v715 = vsub.f32 %v22, %v714
  %716 = vmatpush1.msra.mxu0 %v715
  %717 = vmatprep.subr.mxu0 0.0
  %v718 = vand.u32 %v21, 4294901760
  %v719 = vsub.f32 %v21, %v718
  %720 = vmatpush1.msra.mxu0 %v719
  %721 = vmatprep.subr.mxu0 0.0
  %v722 = vand.u32 %v20, 4294901760
  %v723 = vsub.f32 %v20, %v722
  %724 = vmatpush1.msra.mxu0 %v723
  %725 = vmatprep.subr.mxu0 0.0
  %v726 = vand.u32 %v19, 4294901760
  %v727 = vsub.f32 %v19, %v726
  %728 = vmatpush1.msra.mxu0 %v727
  %729 = vmatprep.subr.mxu0 0.0
  %730 = vmatpush2.msra.mxu0 0.0
  %731 = vmatprep.subr.mxu0 0.0
  %732 = vmatpush2.msra.mxu0 0.0
  %733 = vmatprep.subr.mxu0 0.0
  %734 = vmatpush2.msra.mxu0 0.0
  %735 = vmatprep.subr.mxu0 0.0
  %736 = vmatpush2.msra.mxu0 0.0
  %737 = vmatprep.subr.mxu0 0.0
  %738 = vmatpush2.msra.mxu0 0.0
  %739 = vmatprep.subr.mxu0 0.0
  %740 = vmatpush2.msra.mxu0 0.0
  %741 = vmatprep.subr.mxu0 0.0
  %742 = vmatpush2.msra.mxu0 0.0
  %743 = vmatprep.subr.mxu0 0.0
  %744 = vmatpush2.msra.mxu0 0.0
  %745 = vmatprep.subr.mxu0 0.0
  %746 = vmatpush2.msra.mxu0 0.0
  %747 = vmatprep.subr.mxu0 0.0
  %748 = vmatpush2.msra.mxu0 0.0
  %749 = vmatprep.subr.mxu0 0.0
  %750 = vmatpush2.msra.mxu0 0.0
  %751 = vmatprep.subr.mxu0 0.0
  %752 = vmatpush2.msra.mxu0 0.0
  %753 = vmatprep.subr.mxu0 0.0
  %754 = vmatpush2.msra.mxu0 0.0
  %755 = vmatprep.subr.mxu0 0.0
  %756 = vmatpush2.msra.mxu0 0.0
  %757 = vmatprep.subr.mxu0 0.0
  %758 = vmatpush2.msra.mxu0 0.0
  %759 = vmatprep.subr.mxu0 0.0
  %760 = vmatpush2.msra.mxu0 0.0
  %761 = vmatprep.mubr.f32.mxu0 0.0
  %v762 = vand.u32 %v517, 4294901760
  %v763 = vsub.f32 %v517, %v762
  %764 = vmatmul.mubr.f32.gmra.mxu0 %v763
  %v765 = vpop.f32.mrf.mxu0
  %v766 = vadd.f32 %v686, %v765
  %v767 = vpop.f32.mrf.mxu0
  %768 = vdwg.mxu0
  %769 = vmatprep.subr.mxu0 0.0
  %770 = vmatpush1.msra.mxu0 0.0
  %771 = vmatprep.subr.mxu0 0.0
  %772 = vmatpush1.msra.mxu0 0.0
  %773 = vmatprep.subr.mxu0 0.0
  %774 = vmatpush1.msra.mxu0 0.0
  %775 = vmatprep.subr.mxu0 0.0
  %776 = vmatpush1.msra.mxu0 0.0
  %777 = vmatprep.subr.mxu0 0.0
  %778 = vmatpush1.msra.mxu0 0.0
  %779 = vmatprep.subr.mxu0 0.0
  %780 = vmatpush1.msra.mxu0 0.0
  %781 = vmatprep.subr.mxu0 0.0
  %782 = vmatpush1.msra.mxu0 0.0
  %783 = vmatprep.subr.mxu0 0.0
  %784 = vmatpush1.msra.mxu0 0.0
  %785 = vmatprep.subr.mxu0 0.0
  %786 = vmatpush1.msra.mxu0 0.0
  %787 = vmatprep.subr.mxu0 0.0
  %788 = vmatpush1.msra.mxu0 0.0
  %789 = vmatprep.subr.mxu0 0.0
  %790 = vmatpush1.msra.mxu0 0.0
  %791 = vmatprep.subr.mxu0 0.0
  %792 = vmatpush1.msra.mxu0 0.0
  %793 = vmatprep.subr.mxu0 0.0
  %v794 = vand.u32 %v22, 4294901760
  %795 = vmatpush1.msra.mxu0 %v794
  %796 = vmatprep.subr.mxu0 0.0
  %v797 = vand.u32 %v21, 4294901760
  %798 = vmatpush1.msra.mxu0 %v797
  %799 = vmatprep.subr.mxu0 0.0
  %v800 = vand.u32 %v20, 4294901760
  %801 = vmatpush1.msra.mxu0 %v800
  %802 = vmatprep.subr.mxu0 0.0
  %v803 = vand.u32 %v19, 4294901760
  %804 = vmatpush1.msra.mxu0 %v803
  %805 = vmatprep.subr.mxu0 0.0
  %806 = vmatpush2.msra.mxu0 0.0
  %807 = vmatprep.subr.mxu0 0.0
  %808 = vmatpush2.msra.mxu0 0.0
  %809 = vmatprep.subr.mxu0 0.0
  %810 = vmatpush2.msra.mxu0 0.0
  %811 = vmatprep.subr.mxu0 0.0
  %812 = vmatpush2.msra.mxu0 0.0
  %813 = vmatprep.subr.mxu0 0.0
  %814 = vmatpush2.msra.mxu0 0.0
  %815 = vmatprep.subr.mxu0 0.0
  %816 = vmatpush2.msra.mxu0 0.0
  %817 = vmatprep.subr.mxu0 0.0
  %818 = vmatpush2.msra.mxu0 0.0
  %819 = vmatprep.subr.mxu0 0.0
  %820 = vmatpush2.msra.mxu0 0.0
  %821 = vmatprep.subr.mxu0 0.0
  %822 = vmatpush2.msra.mxu0 0.0
  %823 = vmatprep.subr.mxu0 0.0
  %824 = vmatpush2.msra.mxu0 0.0
  %825 = vmatprep.subr.mxu0 0.0
  %826 = vmatpush2.msra.mxu0 0.0
  %827 = vmatprep.subr.mxu0 0.0
  %828 = vmatpush2.msra.mxu0 0.0
  %829 = vmatprep.subr.mxu0 0.0
  %830 = vmatpush2.msra.mxu0 0.0
  %831 = vmatprep.subr.mxu0 0.0
  %832 = vmatpush2.msra.mxu0 0.0
  %833 = vmatprep.subr.mxu0 0.0
  %834 = vmatpush2.msra.mxu0 0.0
  %835 = vmatprep.subr.mxu0 0.0
  %836 = vmatpush2.msra.mxu0 0.0
  %837 = vmatprep.mubr.f32.mxu0 0.0
  %v838 = vand.u32 %v517, 4294901760
  %v839 = vsub.f32 %v517, %v838
  %v840 = vand.u32 %v839, 4294901760
  %841 = vmatmul.mubr.f32.gmra.mxu0 %v840
  %v842 = vpop.f32.mrf.mxu0
  %v843 = vadd.f32 %v766, %v842
  %v844 = vpop.f32.mrf.mxu0
  %845 = vdwg.mxu0
  %846 = vmatprep.subr.mxu0 0.0
  %847 = vmatpush1.msra.mxu0 0.0
  %848 = vmatprep.subr.mxu0 0.0
  %849 = vmatpush1.msra.mxu0 0.0
  %850 = vmatprep.subr.mxu0 0.0
  %851 = vmatpush1.msra.mxu0 0.0
  %852 = vmatprep.subr.mxu0 0.0
  %853 = vmatpush1.msra.mxu0 0.0
  %854 = vmatprep.subr.mxu0 0.0
  %855 = vmatpush1.msra.mxu0 0.0
  %856 = vmatprep.subr.mxu0 0.0
  %857 = vmatpush1.msra.mxu0 0.0
  %858 = vmatprep.subr.mxu0 0.0
  %859 = vmatpush1.msra.mxu0 0.0
  %860 = vmatprep.subr.mxu0 0.0
  %861 = vmatpush1.msra.mxu0 0.0
  %862 = vmatprep.subr.mxu0 0.0
  %863 = vmatpush1.msra.mxu0 0.0
  %864 = vmatprep.subr.mxu0 0.0
  %865 = vmatpush1.msra.mxu0 0.0
  %866 = vmatprep.subr.mxu0 0.0
  %867 = vmatpush1.msra.mxu0 0.0
  %868 = vmatprep.subr.mxu0 0.0
  %869 = vmatpush1.msra.mxu0 0.0
  %870 = vmatprep.subr.mxu0 0.0
  %v871 = vand.u32 %v22, 4294901760
  %v872 = vsub.f32 %v22, %v871
  %v873 = vand.u32 %v872, 4294901760
  %874 = vmatpush1.msra.mxu0 %v873
  %875 = vmatprep.subr.mxu0 0.0
  %v876 = vand.u32 %v21, 4294901760
  %v877 = vsub.f32 %v21, %v876
  %v878 = vand.u32 %v877, 4294901760
  %879 = vmatpush1.msra.mxu0 %v878
  %880 = vmatprep.subr.mxu0 0.0
  %v881 = vand.u32 %v20, 4294901760
  %v882 = vsub.f32 %v20, %v881
  %v883 = vand.u32 %v882, 4294901760
  %884 = vmatpush1.msra.mxu0 %v883
  %885 = vmatprep.subr.mxu0 0.0
  %v886 = vand.u32 %v19, 4294901760
  %v887 = vsub.f32 %v19, %v886
  %v888 = vand.u32 %v887, 4294901760
  %889 = vmatpush1.msra.mxu0 %v888
  %890 = vmatprep.subr.mxu0 0.0
  %891 = vmatpush2.msra.mxu0 0.0
  %892 = vmatprep.subr.mxu0 0.0
  %893 = vmatpush2.msra.mxu0 0.0
  %894 = vmatprep.subr.mxu0 0.0
  %895 = vmatpush2.msra.mxu0 0.0
  %896 = vmatprep.subr.mxu0 0.0
  %897 = vmatpush2.msra.mxu0 0.0
  %898 = vmatprep.subr.mxu0 0.0
  %899 = vmatpush2.msra.mxu0 0.0
  %900 = vmatprep.subr.mxu0 0.0
  %901 = vmatpush2.msra.mxu0 0.0
  %902 = vmatprep.subr.mxu0 0.0
  %903 = vmatpush2.msra.mxu0 0.0
  %904 = vmatprep.subr.mxu0 0.0
  %905 = vmatpush2.msra.mxu0 0.0
  %906 = vmatprep.subr.mxu0 0.0
  %907 = vmatpush2.msra.mxu0 0.0
  %908 = vmatprep.subr.mxu0 0.0
  %909 = vmatpush2.msra.mxu0 0.0
  %910 = vmatprep.subr.mxu0 0.0
  %911 = vmatpush2.msra.mxu0 0.0
  %912 = vmatprep.subr.mxu0 0.0
  %913 = vmatpush2.msra.mxu0 0.0
  %914 = vmatprep.subr.mxu0 0.0
  %915 = vmatpush2.msra.mxu0 0.0
  %916 = vmatprep.subr.mxu0 0.0
  %917 = vmatpush2.msra.mxu0 0.0
  %918 = vmatprep.subr.mxu0 0.0
  %919 = vmatpush2.msra.mxu0 0.0
  %920 = vmatprep.subr.mxu0 0.0
  %921 = vmatpush2.msra.mxu0 0.0
  %922 = vmatprep.mubr.f32.mxu0 0.0
  %v923 = vand.u32 %v517, 4294901760
  %924 = vmatmul.mubr.f32.gmra.mxu0 %v923
  %v925 = vpop.f32.mrf.mxu0
  %v926 = vadd.f32 %v843, %v925
  %v927 = vpop.f32.mrf.mxu0
  %928 = vdwg.mxu0
  %929 = vmatprep.subr.mxu0 0.0
  %930 = vmatpush1.msra.mxu0 0.0
  %931 = vmatprep.subr.mxu0 0.0
  %932 = vmatpush1.msra.mxu0 0.0
  %933 = vmatprep.subr.mxu0 0.0
  %934 = vmatpush1.msra.mxu0 0.0
  %935 = vmatprep.subr.mxu0 0.0
  %936 = vmatpush1.msra.mxu0 0.0
  %937 = vmatprep.subr.mxu0 0.0
  %938 = vmatpush1.msra.mxu0 0.0
  %939 = vmatprep.subr.mxu0 0.0
  %940 = vmatpush1.msra.mxu0 0.0
  %941 = vmatprep.subr.mxu0 0.0
  %942 = vmatpush1.msra.mxu0 0.0
  %943 = vmatprep.subr.mxu0 0.0
  %944 = vmatpush1.msra.mxu0 0.0
  %945 = vmatprep.subr.mxu0 0.0
  %946 = vmatpush1.msra.mxu0 0.0
  %947 = vmatprep.subr.mxu0 0.0
  %948 = vmatpush1.msra.mxu0 0.0
  %949 = vmatprep.subr.mxu0 0.0
  %950 = vmatpush1.msra.mxu0 0.0
  %951 = vmatprep.subr.mxu0 0.0
  %952 = vmatpush1.msra.mxu0 0.0
  %953 = vmatprep.subr.mxu0 0.0
  %v954 = vand.u32 %v22, 4294901760
  %955 = vmatpush1.msra.mxu0 %v954
  %956 = vmatprep.subr.mxu0 0.0
  %v957 = vand.u32 %v21, 4294901760
  %958 = vmatpush1.msra.mxu0 %v957
  %959 = vmatprep.subr.mxu0 0.0
  %v960 = vand.u32 %v20, 4294901760
  %961 = vmatpush1.msra.mxu0 %v960
  %962 = vmatprep.subr.mxu0 0.0
  %v963 = vand.u32 %v19, 4294901760
  %964 = vmatpush1.msra.mxu0 %v963
  %965 = vmatprep.subr.mxu0 0.0
  %966 = vmatpush2.msra.mxu0 0.0
  %967 = vmatprep.subr.mxu0 0.0
  %968 = vmatpush2.msra.mxu0 0.0
  %969 = vmatprep.subr.mxu0 0.0
  %970 = vmatpush2.msra.mxu0 0.0
  %971 = vmatprep.subr.mxu0 0.0
  %972 = vmatpush2.msra.mxu0 0.0
  %973 = vmatprep.subr.mxu0 0.0
  %974 = vmatpush2.msra.mxu0 0.0
  %975 = vmatprep.subr.mxu0 0.0
  %976 = vmatpush2.msra.mxu0 0.0
  %977 = vmatprep.subr.mxu0 0.0
  %978 = vmatpush2.msra.mxu0 0.0
  %979 = vmatprep.subr.mxu0 0.0
  %980 = vmatpush2.msra.mxu0 0.0
  %981 = vmatprep.subr.mxu0 0.0
  %982 = vmatpush2.msra.mxu0 0.0
  %983 = vmatprep.subr.mxu0 0.0
  %984 = vmatpush2.msra.mxu0 0.0
  %985 = vmatprep.subr.mxu0 0.0
  %986 = vmatpush2.msra.mxu0 0.0
  %987 = vmatprep.subr.mxu0 0.0
  %988 = vmatpush2.msra.mxu0 0.0
  %989 = vmatprep.subr.mxu0 0.0
  %990 = vmatpush2.msra.mxu0 0.0
  %991 = vmatprep.subr.mxu0 0.0
  %992 = vmatpush2.msra.mxu0 0.0
  %993 = vmatprep.subr.mxu0 0.0
  %994 = vmatpush2.msra.mxu0 0.0
  %995 = vmatprep.subr.mxu0 0.0
  %996 = vmatpush2.msra.mxu0 0.0
  %997 = vmatprep.mubr.f32.mxu0 0.0
  %v998 = vand.u32 %v517, 4294901760
  %999 = vmatmul.mubr.f32.gmra.mxu0 %v998
  %v1000 = vpop.f32.mrf.mxu0
  %v1001 = vadd.f32 %v926, %v1000
  %v1002 = vpop.f32.mrf.mxu0
  %1003 = vdwg.mxu0
  %v1004 = vld [vmem:[%s3] sm:$0x1]
  %v1006 = vlaneseq
  %v1007 = vshrl.u32 %v1006, 7
  %v1008 = vsub.s32 0, %v1007
  %v1009 = vrot.slane %v1004, %v1008
  %v1011 = vadd.f32 %v1001, %v1009
  %vm1012 = vcmask 31744
  %1013 = vst.msk [vmem:[%s4] sm:$0xff] %vm1012, %v1011
  // Predicated region
  $region18: #{tpu_custom_call.1} parent=0 // pred_check
    _
  $region19: #{tpu_custom_call.1} parent=0 // pred_check_branch
    %1015 = sbr.rel (0) target = $region21
  $region20: #{tpu_custom_call.1} parent=0 // pred_region
    _
  $region21: #{tpu_custom_call.1} parent=0 // pred_fallthru
    _
  // Predicated region
  $region22: #{tpu_custom_call.1} parent=0 // pred_check
    _
  $region23: #{tpu_custom_call.1} parent=0 // pred_check_branch
    %1017 = sbr.rel (0) target = $region25
  $region24: #{tpu_custom_call.1} parent=0 // pred_region
    _
  $region25: #{tpu_custom_call.1} parent=0 // pred_fallthru
    _

</llo_original>
